<compile_context>
chip_gen: v5e
topology: v5e:2x2
jax: 0.10.0
libtpu: 0.0.40
codegen_flags: <defaults>
</compile_context>

<pallas_src>
import jax
import jax.numpy as jnp
from jax.experimental import pallas as pl
from jax.experimental.pallas import tpu as pltpu


# --------------------------------------------------------------------------
# Kernels
# --------------------------------------------------------------------------
def _ffn_kernel_f32out(x_ref, w1_ref, b1_ref, w2_ref, b2_ref, o_ref):
    # f32 output: accumulate directly into the resident output block.
    f = pl.program_id(1)

    @pl.when(f == 0)
    def _init():
        # Fold b2 into the accumulator init.
        o_ref[...] = jnp.broadcast_to(b2_ref[...], o_ref.shape)

    h = jnp.dot(x_ref[...], w1_ref[...], preferred_element_type=jnp.float32)
    h = jnp.maximum(h + b1_ref[...], 0.0)          # b1 stays f32
    o_ref[...] += jnp.dot(h.astype(w2_ref.dtype), w2_ref[...],
                          preferred_element_type=jnp.float32)


def _ffn_kernel_acc(x_ref, w1_ref, b1_ref, w2_ref, b2_ref, o_ref, acc_ref):
    # Low-precision output: accumulate in an f32 VMEM scratch, cast at the end.
    f = pl.program_id(1)

    @pl.when(f == 0)
    def _init():
        acc_ref[...] = jnp.broadcast_to(b2_ref[...], acc_ref.shape)

    h = jnp.dot(x_ref[...], w1_ref[...], preferred_element_type=jnp.float32)
    h = jnp.maximum(h + b1_ref[...], 0.0)
    acc_ref[...] += jnp.dot(h.astype(w2_ref.dtype), w2_ref[...],
                            preferred_element_type=jnp.float32)

    @pl.when(f == pl.num_programs(1) - 1)
    def _finalize():
        o_ref[...] = acc_ref[...].astype(o_ref.dtype)


# --------------------------------------------------------------------------
# Wrapper
# --------------------------------------------------------------------------
def _round_up(n, m):
    return ((n + m - 1) // m) * m


def _pad2d(a, rows, cols):
    pr, pc = rows - a.shape[0], cols - a.shape[1]
    if pr == 0 and pc == 0:
        return a
    return jnp.pad(a, ((0, pr), (0, pc)))


def _vmem_capacity_bytes():
    try:
        return int(pltpu.get_tpu_info().vmem_capacity_bytes)
    except Exception:
        return 64 * 1024 * 1024  # conservative (v7x-sized) fallback


def position_wise_ffn(x, w1, b1, w2, b2, *, tm=None, tf=None,
                      compute_dtype=jnp.bfloat16,
                      vmem_limit_bytes=None):
    """x: (batch, seq, d_model). w1: (d_model, d_ff), w2: (d_ff, d_model).

    compute_dtype: dtype for x / W1 / W2 inside the matmuls (default bf16).
    Biases are kept in f32 and accumulation is always f32.
    """
    batch, seq, d_model = x.shape
    d_ff = w1.shape[1]
    out_dtype = x.dtype

    cdt = jnp.dtype(x.dtype if compute_dtype is None else compute_dtype)
    out_is_f32 = jnp.dtype(out_dtype) == jnp.dtype(jnp.float32)

    M = batch * seq
    x2d = x.reshape(M, d_model).astype(cdt)
    w1c = w1.astype(cdt)
    w2c = w2.astype(cdt)
    b1f = b1.astype(jnp.float32)
    b2f = b2.astype(jnp.float32)

    # ---- Generation-aware tile defaults -------------------------------
    vmem_cap = _vmem_capacity_bytes()
    big_vmem = vmem_cap >= 96 * 1024 * 1024        # v5e / v6e (128 MiB)
    if tf is None:
        tf = 512 if big_vmem else 256              # v7x (64 MiB/TC) -> 256
    if tm is None:
        tm = 768 if big_vmem else 512              # past the flop/byte ridge

    # ---- Tile / padding geometry --------------------------------------
    # Token tile: multiple of 16 for packed bf16 sublanes (8 for f32).
    tm_align = 16 if cdt.itemsize < 4 else 8
    tm = max(tm_align, (tm // tm_align) * tm_align)
    M_ceil = _round_up(M, tm_align)
    tm = min(tm, M_ceil)
    # Give both v7x TensorCores at least one parallel i tile when M permits.
    if M_ceil >= 2 * tm_align and M_ceil // tm < 2:
        tm = _round_up((M_ceil + 1) // 2, tm_align)
    M_p = _round_up(M, tm)

    # Lane-dense feature axes (multiples of 128).
    dm_p = _round_up(d_model, 128)
    tf = max(128, (tf // 128) * 128)
    tf = min(tf, _round_up(d_ff, 128))
    d_ff_p = _round_up(d_ff, tf)

    # ---- Zero-pad operands (exact: padded lanes contribute zero) -------
    x_p = _pad2d(x2d, M_p, dm_p)
    w1_p = _pad2d(w1c, dm_p, d_ff_p)
    b1_p = _pad2d(b1f.reshape(1, d_ff), 1, d_ff_p)
    w2_p = _pad2d(w2c, d_ff_p, dm_p)
    b2_p = _pad2d(b2f.reshape(1, d_model), 1, dm_p)

    grid = (M_p // tm, d_ff_p // tf)

    # ---- VMEM budget derived from the tiles (2 bufs per streamed input) --
    out_size = jnp.dtype(out_dtype).itemsize
    est = (2 * tm * dm_p * cdt.itemsize          # x tile
           + 2 * dm_p * tf * cdt.itemsize        # W1 slab
           + 2 * tf * 4                          # b1 (f32)
           + 2 * tf * dm_p * cdt.itemsize        # W2 slab
           + 2 * dm_p * 4                        # b2 (f32)
           + 2 * tm * dm_p * out_size)           # output tile
    if not out_is_f32:
        est += tm * dm_p * 4                     # f32 accumulator scratch
    if vmem_limit_bytes is None:
        vmem_limit_bytes = min(int(est * 1.5) + (8 << 20),
                               vmem_cap - (8 << 20))
        vmem_limit_bytes = max(vmem_limit_bytes, 32 << 20)

    # ---- Cost estimate (weights re-streamed once per token tile) -------
    n_i = grid[0]
    cost = pl.CostEstimate(
        flops=4 * M_p * dm_p * d_ff_p,           # two matmuls
        transcendentals=0,
        bytes_accessed=(x_p.nbytes
                        + n_i * (w1_p.nbytes + b1_p.nbytes
                                 + w2_p.nbytes + b2_p.nbytes)
                        + M_p * dm_p * out_size),
    )

    kernel = _ffn_kernel_f32out if out_is_f32 else _ffn_kernel_acc
    scratch = [] if out_is_f32 else [pltpu.VMEM((tm, dm_p), jnp.float32)]

    out_p = pl.pallas_call(
        kernel,
        out_shape=jax.ShapeDtypeStruct((M_p, dm_p), out_dtype),
        grid_spec=pltpu.PrefetchScalarGridSpec(
            num_scalar_prefetch=0,
            grid=grid,
            in_specs=[
                pl.BlockSpec((tm, dm_p), lambda i, f: (i, 0)),   # x tile (resident over f)
                pl.BlockSpec((dm_p, tf), lambda i, f: (0, f)),   # W1 slab
                pl.BlockSpec((1, tf), lambda i, f: (0, f)),      # b1 slab (f32)
                pl.BlockSpec((tf, dm_p), lambda i, f: (f, 0)),   # W2 slab
                pl.BlockSpec((1, dm_p), lambda i, f: (0, 0)),    # b2 (f32)
            ],
            out_specs=pl.BlockSpec((tm, dm_p), lambda i, f: (i, 0)),
            scratch_shapes=scratch,
        ),
        compiler_params=pltpu.CompilerParams(
            dimension_semantics=("parallel", "arbitrary"),
            vmem_limit_bytes=vmem_limit_bytes,
        ),
        cost_estimate=cost,
    )(x_p, w1_p, b1_p, w2_p, b2_p)

    return out_p[:M, :d_model].reshape(batch, seq, d_model)


# --------------------------------------------------------------------------
# Reference init + self-test
# --------------------------------------------------------------------------
def _init_params(key, d_model, d_ff, dtype=jnp.float32):
    # Deterministic init mimicking nn.Linear default (uniform +-1/sqrt(fan_in)).
    k1, k2, k3, k4 = jax.random.split(key, 4)
    bound1 = 1.0 / (d_model ** 0.5)
    bound2 = 1.0 / (d_ff ** 0.5)
    # Stored pre-transposed: (in_features, out_features)
    w1 = jax.random.uniform(k1, (d_model, d_ff), dtype, -bound1, bound1)
    b1 = jax.random.uniform(k2, (d_ff,), dtype, -bound1, bound1)
    w2 = jax.random.uniform(k3, (d_ff, d_model), dtype, -bound2, bound2)
    b2 = jax.random.uniform(k4, (d_model,), dtype, -bound2, bound2)
    return w1, b1, w2, b2


if __name__ == "__main__":
    batch, seq, d_model, d_ff = 2, 8, 32, 64
    key = jax.random.PRNGKey(0)
    kx, kp = jax.random.split(key)
    x = jax.random.normal(kx, (batch, seq, d_model), jnp.float32)
    w1, b1, w2, b2 = _init_params(kp, d_model, d_ff)

    # Pure-JAX reference.
    ref = jnp.maximum(x @ w1 + b1, 0.0) @ w2 + b2

    # Default path: bf16 compute, f32 accumulation, f32 output (no scratch).
    out = jax.block_until_ready(position_wise_ffn(x, w1, b1, w2, b2))
    assert out.shape == (batch, seq, d_model) and out.dtype == x.dtype
    assert jnp.allclose(out, ref, atol=5e-2, rtol=5e-2)

    # Full-f32 compute path (exact).
    out_f32 = jax.block_until_ready(
        position_wise_ffn(x, w1, b1, w2, b2, compute_dtype=jnp.float32))
    assert jnp.allclose(out_f32, ref, atol=1e-5, rtol=1e-5)

    # bf16 input/output exercises the acc-scratch kernel variant.
    out_bf16 = jax.block_until_ready(
        position_wise_ffn(x.astype(jnp.bfloat16), w1, b1, w2, b2))
    assert out_bf16.dtype == jnp.bfloat16
    assert jnp.allclose(out_bf16.astype(jnp.float32), ref, atol=1e-1, rtol=1e-1)

    print("KERNEL_OK")
</pallas_src>

<mosaic_0001>
module attributes {stable_mosaic.version = 11 : i64} {
  func.func @_ffn_kernel_f32out(%arg0: i32, %arg1: i32, %arg2: memref<16x128xbf16, #tpu.memory_space<vmem>>, %arg3: memref<128x128xbf16, #tpu.memory_space<vmem>>, %arg4: memref<1x128xf32, #tpu.memory_space<vmem>>, %arg5: memref<128x128xbf16, #tpu.memory_space<vmem>>, %arg6: memref<1x128xf32, #tpu.memory_space<vmem>>, %arg7: memref<16x128xf32, #tpu.memory_space<vmem>>) attributes {dimension_semantics = [#tpu.dimension_semantics<parallel>, #tpu.dimension_semantics<arbitrary>], iteration_bounds = array<i64: 1, 1>, scalar_prefetch = 0 : i64, scratch_operands = 0 : i64, tpu.core_type = #tpu.core_type<tc>, window_params = [{transform_indices = @transform_0, window_bounds = array<i64: 16, 128>}, {transform_indices = @transform_1, window_bounds = array<i64: 128, 128>}, {transform_indices = @transform_2, window_bounds = array<i64: 1, 128>}, {transform_indices = @transform_3, window_bounds = array<i64: 128, 128>}, {pipeline_mode = #tpu.pipeline_mode<synchronous>, transform_indices = @transform_4, window_bounds = array<i64: 1, 128>}, {transform_indices = @transform_5, window_bounds = array<i64: 16, 128>}]} {
    %c0_i32 = arith.constant 0 : i32
    %0 = arith.cmpi eq, %arg1, %c0_i32 : i32
    %1 = arith.extui %0 : i1 to i32
    %c0_i32_0 = arith.constant 0 : i32
    %2 = arith.cmpi ne, %1, %c0_i32_0 : i32
    scf.if %2 {
      %c0_14 = arith.constant 0 : index
      %c0_15 = arith.constant 0 : index
      %17 = vector.load %arg6[%c0_14, %c0_15] : memref<1x128xf32, #tpu.memory_space<vmem>>, vector<1x128xf32>
      %18 = vector.shape_cast %17 : vector<1x128xf32> to vector<1x128xf32>
      %19 = vector.broadcast %18 : vector<1x128xf32> to vector<16x128xf32>
      %c0_16 = arith.constant 0 : index
      %c0_17 = arith.constant 0 : index
      %20 = vector.load %arg7[%c0_16, %c0_17] : memref<16x128xf32, #tpu.memory_space<vmem>>, vector<16x128xf32>
      tpu.vector_store %arg7[%c0_16, %c0_17], %19 {strides = array<i32>} : memref<16x128xf32, #tpu.memory_space<vmem>>, vector<16x128xf32>,
    } else {
    }
    %c0 = arith.constant 0 : index
    %c0_1 = arith.constant 0 : index
    %3 = vector.load %arg2[%c0, %c0_1] : memref<16x128xbf16, #tpu.memory_space<vmem>>, vector<16x128xbf16>
    %c0_2 = arith.constant 0 : index
    %c0_3 = arith.constant 0 : index
    %4 = vector.load %arg3[%c0_2, %c0_3] : memref<128x128xbf16, #tpu.memory_space<vmem>>, vector<128x128xbf16>
    %cst = arith.constant dense<0.000000e+00> : vector<16x128xf32>
    %5 = tpu.matmul %3, %4, %cst {dimension_numbers = #tpu.dot_dimension_numbers<[1], [0], [0], [1], [0, 0, 1, 1], [], []>} : vector<16x128xbf16>, vector<128x128xbf16>, vector<16x128xf32> -> vector<16x128xf32>
    %c0_4 = arith.constant 0 : index
    %c0_5 = arith.constant 0 : index
    %6 = vector.load %arg4[%c0_4, %c0_5] : memref<1x128xf32, #tpu.memory_space<vmem>>, vector<1x128xf32>
    %7 = vector.broadcast %6 : vector<1x128xf32> to vector<16x128xf32>
    %8 = arith.addf %5, %7 : vector<16x128xf32>
    %cst_6 = arith.constant 0.000000e+00 : f32
    %9 = vector.broadcast %cst_6 : f32 to vector<16x128xf32>
    %10 = arith.maximumf %8, %9 : vector<16x128xf32>
    %c0_7 = arith.constant 0 : index
    %c0_8 = arith.constant 0 : index
    %11 = vector.load %arg7[%c0_7, %c0_8] : memref<16x128xf32, #tpu.memory_space<vmem>>, vector<16x128xf32>
    %12 = arith.truncf %10 : vector<16x128xf32> to vector<16x128xbf16>
    %c0_9 = arith.constant 0 : index
    %c0_10 = arith.constant 0 : index
    %13 = vector.load %arg5[%c0_9, %c0_10] : memref<128x128xbf16, #tpu.memory_space<vmem>>, vector<128x128xbf16>
    %cst_11 = arith.constant dense<0.000000e+00> : vector<16x128xf32>
    %14 = tpu.matmul %12, %13, %cst_11 {dimension_numbers = #tpu.dot_dimension_numbers<[1], [0], [0], [1], [0, 0, 1, 1], [], []>} : vector<16x128xbf16>, vector<128x128xbf16>, vector<16x128xf32> -> vector<16x128xf32>
    %15 = arith.addf %11, %14 : vector<16x128xf32>
    %c0_12 = arith.constant 0 : index
    %c0_13 = arith.constant 0 : index
    %16 = vector.load %arg7[%c0_12, %c0_13] : memref<16x128xf32, #tpu.memory_space<vmem>>, vector<16x128xf32>
    tpu.vector_store %arg7[%c0_12, %c0_13], %15 {strides = array<i32>} : memref<16x128xf32, #tpu.memory_space<vmem>>, vector<16x128xf32>,
    return
  }
  func.func @transform_0(%arg0: i32, %arg1: i32) -> (i32, i32) {
    %c0_i32 = arith.constant 0 : i32
    %c0_i32_0 = arith.constant 0 : i32
    return %arg0, %c0_i32 : i32, i32
  }
  func.func @transform_1(%arg0: i32, %arg1: i32) -> (i32, i32) {
    %c0_i32 = arith.constant 0 : i32
    %c0_i32_0 = arith.constant 0 : i32
    return %c0_i32, %arg1 : i32, i32
  }
  func.func @transform_2(%arg0: i32, %arg1: i32) -> (i32, i32) {
    %c0_i32 = arith.constant 0 : i32
    %c0_i32_0 = arith.constant 0 : i32
    return %c0_i32, %arg1 : i32, i32
  }
  func.func @transform_3(%arg0: i32, %arg1: i32) -> (i32, i32) {
    %c0_i32 = arith.constant 0 : i32
    %c0_i32_0 = arith.constant 0 : i32
    return %arg1, %c0_i32 : i32, i32
  }
  func.func @transform_4(%arg0: i32, %arg1: i32) -> (i32, i32) {
    %c0_i32 = arith.constant 0 : i32
    %c0_i32_0 = arith.constant 0 : i32
    %c0_i32_1 = arith.constant 0 : i32
    return %c0_i32, %c0_i32_0 : i32, i32
  }
  func.func @transform_5(%arg0: i32, %arg1: i32) -> (i32, i32) {
    %c0_i32 = arith.constant 0 : i32
    %c0_i32_0 = arith.constant 0 : i32
    return %arg0, %c0_i32 : i32, i32
  }
}

</mosaic_0001>

<llo_original>
// kernel: tpu_custom_call.1
$region0: #{tpu_custom_call.1}
  #allocation0 [shape = 'u32[]', space=smem, size = 0x4, offset = 0x4, fixed_abs, tag = 'smem constant byte address 0x4 - core index']
  #allocation1 [shape = 'u32[72,128]{1,0:T(1,128)}', space=vmem, size = 0x9000, scoped, tag = 'internal scratch']
  %s0 = inlined_call_operand.hbm [shape: bf16[16,128], index: 0, kind: input, shape index: {}]
  %s1 = inlined_call_operand.hbm [shape: bf16[128,128], index: 1, kind: input, shape index: {}]
  %s2 = inlined_call_operand.vmem [shape: f32[1,128], index: 2, kind: input, shape index: {}]
  %s3 = inlined_call_operand.hbm [shape: bf16[128,128], index: 3, kind: input, shape index: {}]
  %s4 = inlined_call_operand.vmem [shape: f32[1,128], index: 4, kind: input, shape index: {}]
  %s5 = inlined_call_operand.hbm [shape: f32[16,128], index: 5, kind: output, shape index: {}]
  %s6 = sld [smem:[#allocation0]]
  $region46: #{tpu_custom_call.1} parent=0
    _
  %s8 = ssub.s32 1, %s6
  %s9 = scalar_select 0, %s8, %s6
  $region1: #{tpu_custom_call.1} parent=0
    #allocation2 [shape = 'u8[4096]{0}', space=vmem, size = 0x1000, scoped, tag = 'input window, operand 0, single buffered']
    #allocation3 [shape = 's32[1]{0}', space=sflag, size = 0x4, scoped, tag = 'scoped memory for tpu_custom_call.1']
    #allocation4 [shape = 's32[1]{0}', space=sflag, size = 0x4, scoped, tag = 'scoped memory for tpu_custom_call.1']
    #allocation5 [shape = 'u8[32768]{0}', space=vmem, size = 0x8000, scoped, tag = 'input window, operand 1, single buffered']
    #allocation6 [shape = 's32[1]{0}', space=sflag, size = 0x4, scoped, tag = 'scoped memory for tpu_custom_call.1']
    #allocation7 [shape = 'u8[32768]{0}', space=vmem, size = 0x8000, scoped, tag = 'input window, operand 3, single buffered']
    #allocation8 [shape = 'u8[8192]{0}', space=vmem, size = 0x2000, scoped, tag = 'output window, operand 0, single buffered']
    %10 = vsyncpa [#allocation3], 0
    %11 = vsyncpa [#allocation6], 0
    %12 = vsyncpa [#allocation4], 0
    // Predicated region
    $region2: #{tpu_custom_call.1} parent=1 // pred_check
      _
    $region3: #{tpu_custom_call.1} parent=1 // pred_check_branch
      %14 = sbr.rel (0) target = $region5
    $region4: #{tpu_custom_call.1} parent=1 // pred_region
      %16 = vsyncadd [#allocation3], 0
      %s17 = sshll.u32 %s0, 4
      %s18 = int_to_ptr.hbm [resolvable:$true] %s17
      %s19 = sshll.u32 [#allocation2], 4
      %s20 = int_to_ptr.vmem [resolvable:$true] %s19
      %25 = dma.hbm_to_vmem [thread:$0]  %s18, 128, %s20, [#allocation3], 64, 64, 4
    $region5: #{tpu_custom_call.1} parent=1 // pred_fallthru
      _
    // Predicated region
    $region6: #{tpu_custom_call.1} parent=1 // pred_check
      _
    $region7: #{tpu_custom_call.1} parent=1 // pred_check_branch
      %27 = sbr.rel (0) target = $region9
    $region8: #{tpu_custom_call.1} parent=1 // pred_region
      %29 = vsyncadd [#allocation6], 0
      %s30 = sshll.u32 %s1, 4
      %s31 = int_to_ptr.hbm [resolvable:$true] %s30
      %s32 = sshll.u32 [#allocation5], 4
      %s33 = int_to_ptr.vmem [resolvable:$true] %s32
      %38 = dma.hbm_to_vmem [thread:$0]  %s31, 1024, %s33, [#allocation6], 64, 64, 4
    $region9: #{tpu_custom_call.1} parent=1 // pred_fallthru
      _
    // Predicated region
    $region10: #{tpu_custom_call.1} parent=1 // pred_check
      _
    $region11: #{tpu_custom_call.1} parent=1 // pred_check_branch
      %40 = sbr.rel (0) target = $region13
    $region12: #{tpu_custom_call.1} parent=1 // pred_region
      _
    $region13: #{tpu_custom_call.1} parent=1 // pred_fallthru
      _
    // Predicated region
    $region14: #{tpu_custom_call.1} parent=1 // pred_check
      _
    $region15: #{tpu_custom_call.1} parent=1 // pred_check_branch
      %42 = sbr.rel (0) target = $region17
    $region16: #{tpu_custom_call.1} parent=1 // pred_region
      %44 = vsyncadd [#allocation6], 0
      %s45 = sshll.u32 %s3, 4
      %s46 = int_to_ptr.hbm [resolvable:$true] %s45
      %s47 = sshll.u32 [#allocation7], 4
      %s48 = int_to_ptr.vmem [resolvable:$true] %s47
      %53 = dma.hbm_to_vmem [thread:$0]  %s46, 1024, %s48, [#allocation6], 64, 64, 4
    $region17: #{tpu_custom_call.1} parent=1 // pred_fallthru
      _
    // Predicated region
    $region18: #{tpu_custom_call.1} parent=1 // pred_check
      _
    $region19: #{tpu_custom_call.1} parent=1 // pred_check_branch
      %55 = sbr.rel (0) target = $region21
    $region20: #{tpu_custom_call.1} parent=1 // pred_region
      _
    $region21: #{tpu_custom_call.1} parent=1 // pred_fallthru
      _
    // Predicated region
    $region22: #{tpu_custom_call.1} parent=1 // pred_check
      _
    $region23: #{tpu_custom_call.1} parent=1 // pred_check_branch
      %57 = sbr.rel (0) target = $region25
    $region24: #{tpu_custom_call.1} parent=1 // pred_region
      %59 = dma.done [#allocation3], 128
    $region25: #{tpu_custom_call.1} parent=1 // pred_fallthru
      _
    // Predicated region
    $region26: #{tpu_custom_call.1} parent=1 // pred_check
      _
    $region27: #{tpu_custom_call.1} parent=1 // pred_check_branch
      %61 = sbr.rel (0) target = $region29
    $region28: #{tpu_custom_call.1} parent=1 // pred_region
      %63 = dma.done [#allocation6], 1024
    $region29: #{tpu_custom_call.1} parent=1 // pred_fallthru
      _
    // Predicated region
    $region30: #{tpu_custom_call.1} parent=1 // pred_check
      _
    $region31: #{tpu_custom_call.1} parent=1 // pred_check_branch
      %65 = sbr.rel (0) target = $region33
    $region32: #{tpu_custom_call.1} parent=1 // pred_region
      %67 = dma.done [#allocation6], 1024
    $region33: #{tpu_custom_call.1} parent=1 // pred_fallthru
      _
    %p68 = scmp.eq.s32.totalorder 0, 0
    // Predicated region
    $region34: #{tpu_custom_call.1} parent=1 // pred_check
      %p69 = pneg %p68
    $region35: #{tpu_custom_call.1} parent=1 // pred_check_branch
      %71 = sbr.rel (%p69) target = $region37
    $region36: #{tpu_custom_call.1} parent=1 // pred_region
      %v72 = vld [vmem:[%s4] sm:$0x1]
      %v74 = vperm.slane %v72, 0
      %76 = vst [vmem:[#allocation8] sm:$0xff] %v74
      %77 = vst [vmem:[#allocation8 + $0x8] sm:$0xff] %v74
    $region37: #{tpu_custom_call.1} parent=1 // pred_fallthru
      _
    %v78 = vld [vmem:[#allocation2] sm:$0xf]
    %v79 = vld [vmem:[#allocation2 + $0x4] sm:$0xf]
    %v80 = vld [vmem:[#allocation5] sm:$0xf]
    %v81 = vld [vmem:[#allocation5 + $0x4] sm:$0xf]
    %v82 = vld [vmem:[#allocation5 + $0x8] sm:$0xf]
    %v83 = vld [vmem:[#allocation5 + $0xc] sm:$0xf]
    %v84 = vld [vmem:[#allocation5 + $0x10] sm:$0xf]
    %v85 = vld [vmem:[#allocation5 + $0x14] sm:$0xf]
    %v86 = vld [vmem:[#allocation5 + $0x18] sm:$0xf]
    %v87 = vld [vmem:[#allocation5 + $0x1c] sm:$0xf]
    %v88 = vld [vmem:[#allocation5 + $0x20] sm:$0xf]
    %v89 = vld [vmem:[#allocation5 + $0x24] sm:$0xf]
    %v90 = vld [vmem:[#allocation5 + $0x28] sm:$0xf]
    %v91 = vld [vmem:[#allocation5 + $0x2c] sm:$0xf]
    %v92 = vld [vmem:[#allocation5 + $0x30] sm:$0xf]
    %v93 = vld [vmem:[#allocation5 + $0x34] sm:$0xf]
    %v94 = vld [vmem:[#allocation5 + $0x38] sm:$0xf]
    %v95 = vld [vmem:[#allocation5 + $0x3c] sm:$0xf]
    %v96 = vld [vmem:[%s2] sm:$0x1]
    %v98 = vperm.slane %v96, 0
    %v102 = vunpack.c.l.b16 %v78
    %v103 = vunpack.c.l.b16 %v79
    %v104 = vpack.c.b16 %v103, %v102
    %v122 = vunpack.c.l.b16 %v80
    %v123 = vunpack.c.l.b16 %v81
    %v124 = vunpack.c.l.b16 %v82
    %v125 = vunpack.c.l.b16 %v83
    %v126 = vunpack.c.l.b16 %v84
    %v127 = vunpack.c.l.b16 %v85
    %v128 = vunpack.c.l.b16 %v86
    %v129 = vunpack.c.l.b16 %v87
    %v130 = vunpack.c.l.b16 %v88
    %v131 = vunpack.c.l.b16 %v89
    %v132 = vunpack.c.l.b16 %v90
    %v133 = vunpack.c.l.b16 %v91
    %v134 = vunpack.c.l.b16 %v92
    %v135 = vunpack.c.l.b16 %v93
    %v136 = vunpack.c.l.b16 %v94
    %v137 = vunpack.c.l.b16 %v95
    %v138 = vpack.c.b16 %v123, %v122
    %v139 = vpack.c.b16 %v125, %v124
    %v140 = vpack.c.b16 %v127, %v126
    %v141 = vpack.c.b16 %v129, %v128
    %v142 = vpack.c.b16 %v131, %v130
    %v143 = vpack.c.b16 %v133, %v132
    %v144 = vpack.c.b16 %v135, %v134
    %v145 = vpack.c.b16 %v137, %v136
    %154 = vmatpush.bf16.msra.mxu0 %v145
    %155 = vmatpush.bf16.msra.mxu0 %v144
    %156 = vmatpush.bf16.msra.mxu0 %v143
    %157 = vmatpush.bf16.msra.mxu0 %v142
    %158 = vmatpush.bf16.msra.mxu0 %v141
    %159 = vmatpush.bf16.msra.mxu0 %v140
    %160 = vmatpush.bf16.msra.mxu0 %v139
    %161 = vmatpush.bf16.msra.mxu0 %v138
    %162 = vmatmul.bf16.gmra.mxu0 %v104
    %v163 = vpop.f32.mrf.mxu0
    %v164 = vadd.f32 %v98, %v163
    %v165 = vpop.f32.mrf.mxu0
    %v166 = vadd.f32 %v98, %v165
    %167 = vdwg.mxu0
    %v168 = vmax.f32 %v164, 0.0
    %v169 = vmax.f32 %v166, 0.0
    %v170 = vld [vmem:[#allocation8] sm:$0xff]
    %v171 = vld [vmem:[#allocation8 + $0x8] sm:$0xff]
    %v172 = vpack.c.bf16 %v169, %v168
    %v173 = vld [vmem:[#allocation7] sm:$0xf]
    %v174 = vld [vmem:[#allocation7 + $0x4] sm:$0xf]
    %v175 = vld [vmem:[#allocation7 + $0x8] sm:$0xf]
    %v176 = vld [vmem:[#allocation7 + $0xc] sm:$0xf]
    %v177 = vld [vmem:[#allocation7 + $0x10] sm:$0xf]
    %v178 = vld [vmem:[#allocation7 + $0x14] sm:$0xf]
    %v179 = vld [vmem:[#allocation7 + $0x18] sm:$0xf]
    %v180 = vld [vmem:[#allocation7 + $0x1c] sm:$0xf]
    %v181 = vld [vmem:[#allocation7 + $0x20] sm:$0xf]
    %v182 = vld [vmem:[#allocation7 + $0x24] sm:$0xf]
    %v183 = vld [vmem:[#allocation7 + $0x28] sm:$0xf]
    %v184 = vld [vmem:[#allocation7 + $0x2c] sm:$0xf]
    %v185 = vld [vmem:[#allocation7 + $0x30] sm:$0xf]
    %v186 = vld [vmem:[#allocation7 + $0x34] sm:$0xf]
    %v187 = vld [vmem:[#allocation7 + $0x38] sm:$0xf]
    %v188 = vld [vmem:[#allocation7 + $0x3c] sm:$0xf]
    %v205 = vunpack.c.l.b16 %v173
    %v206 = vunpack.c.l.b16 %v174
    %v207 = vunpack.c.l.b16 %v175
    %v208 = vunpack.c.l.b16 %v176
    %v209 = vunpack.c.l.b16 %v177
    %v210 = vunpack.c.l.b16 %v178
    %v211 = vunpack.c.l.b16 %v179
    %v212 = vunpack.c.l.b16 %v180
    %v213 = vunpack.c.l.b16 %v181
    %v214 = vunpack.c.l.b16 %v182
    %v215 = vunpack.c.l.b16 %v183
    %v216 = vunpack.c.l.b16 %v184
    %v217 = vunpack.c.l.b16 %v185
    %v218 = vunpack.c.l.b16 %v186
    %v219 = vunpack.c.l.b16 %v187
    %v220 = vunpack.c.l.b16 %v188
    %v221 = vpack.c.b16 %v206, %v205
    %v222 = vpack.c.b16 %v208, %v207
    %v223 = vpack.c.b16 %v210, %v209
    %v224 = vpack.c.b16 %v212, %v211
    %v225 = vpack.c.b16 %v214, %v213
    %v226 = vpack.c.b16 %v216, %v215
    %v227 = vpack.c.b16 %v218, %v217
    %v228 = vpack.c.b16 %v220, %v219
    %237 = vmatpush.bf16.msra.mxu0 %v228
    %238 = vmatpush.bf16.msra.mxu0 %v227
    %239 = vmatpush.bf16.msra.mxu0 %v226
    %240 = vmatpush.bf16.msra.mxu0 %v225
    %241 = vmatpush.bf16.msra.mxu0 %v224
    %242 = vmatpush.bf16.msra.mxu0 %v223
    %243 = vmatpush.bf16.msra.mxu0 %v222
    %244 = vmatpush.bf16.msra.mxu0 %v221
    %245 = vmatmul.bf16.gmra.mxu0 %v172
    %v246 = vpop.f32.mrf.mxu0
    %v247 = vadd.f32 0.0, %v246
    %v248 = vpop.f32.mrf.mxu0
    %v249 = vadd.f32 0.0, %v248
    %250 = vdwg.mxu0
    %v251 = vadd.f32 %v170, %v247
    %v252 = vadd.f32 %v171, %v249
    %253 = vst [vmem:[#allocation8] sm:$0xff] %v251
    %254 = vst [vmem:[#allocation8 + $0x8] sm:$0xff] %v252
    // Predicated region
    $region38: #{tpu_custom_call.1} parent=1 // pred_check
      _
    $region39: #{tpu_custom_call.1} parent=1 // pred_check_branch
      %256 = sbr.rel (0) target = $region41
    $region40: #{tpu_custom_call.1} parent=1 // pred_region
      %258 = vsyncadd [#allocation4], 0
      %s259 = sshll.u32 [#allocation8], 4
      %s260 = int_to_ptr.vmem [resolvable:$true] %s259
      %s261 = sshll.u32 %s5, 4
      %s262 = int_to_ptr.hbm [resolvable:$true] %s261
      %267 = dma.vmem_to_hbm [thread:$0]  %s260, 256, %s262, [#allocation4], 128, 128, 8
    $region41: #{tpu_custom_call.1} parent=1 // pred_fallthru
      _
    // Predicated region
    $region42: #{tpu_custom_call.1} parent=1 // pred_check
      _
    $region43: #{tpu_custom_call.1} parent=1 // pred_check_branch
      %269 = sbr.rel (0) target = $region45
    $region44: #{tpu_custom_call.1} parent=1 // pred_region
      %271 = dma.done [#allocation4], 256
    $region45: #{tpu_custom_call.1} parent=1 // pred_fallthru
      _
    %272 = vsyncpa [#allocation3], 1
    %273 = vsyncpa [#allocation6], 1
    %274 = vsyncpa [#allocation4], 1

</llo_original>
